<compile_context>
chip_gen: v7x
topology: tpu7x:2x2x1
jax: 0.10.0
libtpu: 0.0.40
codegen_flags: <defaults>
</compile_context>

<pallas_src>
import jax
import jax.numpy as jnp
from jax import lax
from jax.experimental import pallas as pl
from jax.experimental.pallas import tpu as pltpu

# ----- model hyper-parameters (small, consistent with the module) -----
N_EMBD = 32
N_HEAD = 4
HEAD_SIZE = N_EMBD // N_HEAD   # 8
BLOCK_SIZE = 8                 # max sequence length (tril buffer size)
BATCH = 2
SEQ = 8                        # T <= BLOCK_SIZE


# ---------------------------------------------------------------------------
# Fused kernel: one grid step = one batch element.
#   qkv  = x @ W_qkv                                (T, 3*NH*H)
#   per head: s = (q k^T) * H^-0.5, causal mask, softmax, o_h = s @ v
#   y    = concat_h(o_h) @ W_proj + b               (T, C)  -> lane-dense store
# ---------------------------------------------------------------------------
def mha_fused_kernel(x_ref, wqkv_ref, wproj_ref, b_ref, o_ref):
    x = x_ref[0]                                                     # (T, C)
    qkv = jnp.dot(x, wqkv_ref[...],
                  preferred_element_type=jnp.float32)                # (T, 3*NH*H)

    t = x.shape[0]
    row = lax.broadcasted_iota(jnp.int32, (t, t), 0)
    col = lax.broadcasted_iota(jnp.int32, (t, t), 1)
    causal = col <= row
    scale = jnp.float32(HEAD_SIZE) ** -0.5

    ch = N_HEAD * HEAD_SIZE
    head_outs = []
    for h in range(N_HEAD):                                          # unrolled, NH=4
        q = qkv[:, h * HEAD_SIZE:(h + 1) * HEAD_SIZE]                # (T, H)
        k = qkv[:, ch + h * HEAD_SIZE: ch + (h + 1) * HEAD_SIZE]     # (T, H)
        v = qkv[:, 2 * ch + h * HEAD_SIZE: 2 * ch + (h + 1) * HEAD_SIZE]

        # contract on last dims: no explicit k.T relayout before the MXU
        s = lax.dot_general(q, k, (((1,), (1,)), ((), ())),
                            preferred_element_type=jnp.float32) * scale  # (T, T)
        s = jnp.where(causal, s, jnp.float32(-jnp.inf))

        m = jnp.max(s, axis=-1, keepdims=True)
        e = jnp.exp(s - m)
        p = e / jnp.sum(e, axis=-1, keepdims=True)

        head_outs.append(jnp.dot(p, v, preferred_element_type=jnp.float32))  # (T, H)

    concat = jnp.concatenate(head_outs, axis=-1)                     # (T, NH*H)
    y = jnp.dot(concat, wproj_ref[...],
                preferred_element_type=jnp.float32)                  # (T, C)
    o_ref[0] = y + b_ref[...]                                        # bias (1, C) broadcasts


def multi_head_attention(x, wq, wk, wv, w_proj, b_proj):
    """x: (B, T, C) f32; wq/wk/wv: (NH, C, H); w_proj: (NH*H, C); b_proj: (1, C)."""
    B, T, C = x.shape
    H, NH = HEAD_SIZE, N_HEAD

    # Pack QKV weights once on the wrapper side: (NH, C, H) -> (C, NH*H), concat q|k|v.
    def pack(w):
        return jnp.transpose(w, (1, 0, 2)).reshape(C, NH * H)
    w_qkv = jnp.concatenate([pack(wq), pack(wk), pack(wv)], axis=-1)  # (C, 3*NH*H)

    return pl.pallas_call(
        mha_fused_kernel,
        out_shape=jax.ShapeDtypeStruct((B, T, C), jnp.float32),
        grid=(B,),
        in_specs=[
            pl.BlockSpec((1, T, C), lambda b: (b, 0, 0)),          # x (per batch)
            pl.BlockSpec((C, 3 * NH * H), lambda b: (0, 0)),       # packed W_qkv
            pl.BlockSpec((NH * H, C), lambda b: (0, 0)),           # W_proj
            pl.BlockSpec((1, C), lambda b: (0, 0)),                # bias
        ],
        out_specs=pl.BlockSpec((1, T, C), lambda b: (b, 0, 0)),
        compiler_params=pltpu.CompilerParams(
            dimension_semantics=("parallel",)),                    # v7x: shard batch over 2 TCs
    )(x, w_qkv, w_proj, b_proj)


if __name__ == "__main__":
    key = jax.random.PRNGKey(0)
    k_x, k_q, k_k, k_v, k_p, k_b = jax.random.split(key, 6)

    # input: (B, T, C)
    x = jax.random.normal(k_x, (BATCH, SEQ, N_EMBD), dtype=jnp.float32)

    # per-head projection weights, stacked (n_head, n_embd, head_size)
    wq = jax.random.normal(k_q, (N_HEAD, N_EMBD, HEAD_SIZE), dtype=jnp.float32) * 0.1
    wk = jax.random.normal(k_k, (N_HEAD, N_EMBD, HEAD_SIZE), dtype=jnp.float32) * 0.1
    wv = jax.random.normal(k_v, (N_HEAD, N_EMBD, HEAD_SIZE), dtype=jnp.float32) * 0.1

    # output projection: (n_head*head_size, n_embd) and bias (1, n_embd)
    w_proj = jax.random.normal(k_p, (N_HEAD * HEAD_SIZE, N_EMBD), dtype=jnp.float32) * 0.1
    b_proj = jax.random.normal(k_b, (1, N_EMBD), dtype=jnp.float32) * 0.1

    out = multi_head_attention(x, wq, wk, wv, w_proj, b_proj)
    out = jax.block_until_ready(out)

    # pure-JAX reference check (same math, eval-mode dropout)
    q = jnp.einsum('btc,hcd->bhtd', x, wq)
    k = jnp.einsum('btc,hcd->bhtd', x, wk)
    v = jnp.einsum('btc,hcd->bhtd', x, wv)
    s = jnp.einsum('bhtd,bhsd->bhts', q, k) * (HEAD_SIZE ** -0.5)
    mask = jnp.tril(jnp.ones((SEQ, SEQ), dtype=bool))
    s = jnp.where(mask[None, None], s, -jnp.inf)
    p = jax.nn.softmax(s, axis=-1)
    ho = jnp.einsum('bhts,bhsd->bhtd', p, v)
    cat = jnp.transpose(ho, (0, 2, 1, 3)).reshape(BATCH, SEQ, N_HEAD * HEAD_SIZE)
    ref = cat @ w_proj + b_proj

    assert jnp.allclose(out, ref, atol=1e-4, rtol=1e-4), "mismatch vs reference"
    print("KERNEL_OK")
</pallas_src>

<mosaic_0001>
module attributes {stable_mosaic.version = 11 : i64} {
  func.func @mha_fused_kernel(%arg0: i32, %arg1: memref<1x8x32xf32, #tpu.memory_space<vmem>>, %arg2: memref<32x96xf32, #tpu.memory_space<vmem>>, %arg3: memref<32x32xf32, #tpu.memory_space<vmem>>, %arg4: memref<1x32xf32, #tpu.memory_space<vmem>>, %arg5: memref<1x8x32xf32, #tpu.memory_space<vmem>>) attributes {dimension_semantics = [#tpu.dimension_semantics<parallel>], iteration_bounds = array<i64: 2>, scalar_prefetch = 0 : i64, scratch_operands = 0 : i64, tpu.core_type = #tpu.core_type<tc>, window_params = [{transform_indices = @transform_0, window_bounds = array<i64: 1, 8, 32>}, {pipeline_mode = #tpu.pipeline_mode<synchronous>, transform_indices = @transform_1, window_bounds = array<i64: 32, 96>}, {pipeline_mode = #tpu.pipeline_mode<synchronous>, transform_indices = @transform_2, window_bounds = array<i64: 32, 32>}, {pipeline_mode = #tpu.pipeline_mode<synchronous>, transform_indices = @transform_3, window_bounds = array<i64: 1, 32>}, {transform_indices = @transform_4, window_bounds = array<i64: 1, 8, 32>}]} {
    %c0 = arith.constant 0 : index
    %c0_0 = arith.constant 0 : index
    %c0_1 = arith.constant 0 : index
    %0 = vector.load %arg1[%c0, %c0_0, %c0_1] : memref<1x8x32xf32, #tpu.memory_space<vmem>>, vector<1x8x32xf32>
    %1 = vector.shape_cast %0 : vector<1x8x32xf32> to vector<8x32xf32>
    %c0_2 = arith.constant 0 : index
    %c0_3 = arith.constant 0 : index
    %2 = vector.load %arg2[%c0_2, %c0_3] : memref<32x96xf32, #tpu.memory_space<vmem>>, vector<32x96xf32>
    %cst = arith.constant dense<0.000000e+00> : vector<8x96xf32>
    %3 = tpu.matmul %1, %2, %cst {dimension_numbers = #tpu.dot_dimension_numbers<[1], [0], [0], [1], [0, 0, 1, 1], [], []>} : vector<8x32xf32>, vector<32x96xf32>, vector<8x96xf32> -> vector<8x96xf32>
    %4 = tpu.iota {dimensions = array<i32: 0>} : vector<8x8xi32>
    %5 = tpu.iota {dimensions = array<i32: 1>} : vector<8x8xi32>
    %6 = arith.cmpi sle, %5, %4 : vector<8x8xi32>
    %cst_4 = arith.constant 8.000000e+00 : f32
    %cst_5 = arith.constant -5.000000e-01 : f32
    %7 = math.powf %cst_4, %cst_5 : f32
    %8 = vector.extract_strided_slice %3 {offsets = [0, 0], sizes = [8, 8], strides = [1, 1]} : vector<8x96xf32> to vector<8x8xf32>
    %9 = vector.extract_strided_slice %3 {offsets = [0, 32], sizes = [8, 8], strides = [1, 1]} : vector<8x96xf32> to vector<8x8xf32>
    %10 = vector.extract_strided_slice %3 {offsets = [0, 64], sizes = [8, 8], strides = [1, 1]} : vector<8x96xf32> to vector<8x8xf32>
    %cst_6 = arith.constant dense<0.000000e+00> : vector<8x8xf32>
    %11 = tpu.matmul %8, %9, %cst_6 {dimension_numbers = #tpu.dot_dimension_numbers<[1], [1], [0], [0], [0, 0, 1, 0], [], []>} : vector<8x8xf32>, vector<8x8xf32>, vector<8x8xf32> -> vector<8x8xf32>
    %12 = vector.broadcast %7 : f32 to vector<8x8xf32>
    %13 = arith.mulf %11, %12 : vector<8x8xf32>
    %cst_7 = arith.constant 0xFF800000 : f32
    %14 = vector.broadcast %cst_7 : f32 to vector<8x8xf32>
    %15 = arith.select %6, %13, %14 : vector<8x8xi1>, vector<8x8xf32>
    %cst_8 = arith.constant dense<0xFF800000> : vector<8xf32>
    %16 = vector.multi_reduction <maximumf>, %15, %cst_8 [1] : vector<8x8xf32> to vector<8xf32>
    %17 = vector.shape_cast %16 : vector<8xf32> to vector<8x1xf32>
    %18 = vector.broadcast %17 : vector<8x1xf32> to vector<8x8xf32>
    %19 = arith.subf %15, %18 : vector<8x8xf32>
    %20 = math.exp %19 : vector<8x8xf32>
    %cst_9 = arith.constant dense<0.000000e+00> : vector<8xf32>
    %21 = vector.multi_reduction <add>, %20, %cst_9 [1] : vector<8x8xf32> to vector<8xf32>
    %22 = vector.shape_cast %21 : vector<8xf32> to vector<8x1xf32>
    %23 = vector.broadcast %22 : vector<8x1xf32> to vector<8x8xf32>
    %24 = arith.divf %20, %23 : vector<8x8xf32>
    %cst_10 = arith.constant dense<0.000000e+00> : vector<8x8xf32>
    %25 = tpu.matmul %24, %10, %cst_10 {dimension_numbers = #tpu.dot_dimension_numbers<[1], [0], [0], [1], [0, 0, 1, 1], [], []>} : vector<8x8xf32>, vector<8x8xf32>, vector<8x8xf32> -> vector<8x8xf32>
    %26 = vector.extract_strided_slice %3 {offsets = [0, 8], sizes = [8, 8], strides = [1, 1]} : vector<8x96xf32> to vector<8x8xf32>
    %27 = vector.extract_strided_slice %3 {offsets = [0, 40], sizes = [8, 8], strides = [1, 1]} : vector<8x96xf32> to vector<8x8xf32>
    %28 = vector.extract_strided_slice %3 {offsets = [0, 72], sizes = [8, 8], strides = [1, 1]} : vector<8x96xf32> to vector<8x8xf32>
    %cst_11 = arith.constant dense<0.000000e+00> : vector<8x8xf32>
    %29 = tpu.matmul %26, %27, %cst_11 {dimension_numbers = #tpu.dot_dimension_numbers<[1], [1], [0], [0], [0, 0, 1, 0], [], []>} : vector<8x8xf32>, vector<8x8xf32>, vector<8x8xf32> -> vector<8x8xf32>
    %30 = vector.broadcast %7 : f32 to vector<8x8xf32>
    %31 = arith.mulf %29, %30 : vector<8x8xf32>
    %cst_12 = arith.constant 0xFF800000 : f32
    %32 = vector.broadcast %cst_12 : f32 to vector<8x8xf32>
    %33 = arith.select %6, %31, %32 : vector<8x8xi1>, vector<8x8xf32>
    %cst_13 = arith.constant dense<0xFF800000> : vector<8xf32>
    %34 = vector.multi_reduction <maximumf>, %33, %cst_13 [1] : vector<8x8xf32> to vector<8xf32>
    %35 = vector.shape_cast %34 : vector<8xf32> to vector<8x1xf32>
    %36 = vector.broadcast %35 : vector<8x1xf32> to vector<8x8xf32>
    %37 = arith.subf %33, %36 : vector<8x8xf32>
    %38 = math.exp %37 : vector<8x8xf32>
    %cst_14 = arith.constant dense<0.000000e+00> : vector<8xf32>
    %39 = vector.multi_reduction <add>, %38, %cst_14 [1] : vector<8x8xf32> to vector<8xf32>
    %40 = vector.shape_cast %39 : vector<8xf32> to vector<8x1xf32>
    %41 = vector.broadcast %40 : vector<8x1xf32> to vector<8x8xf32>
    %42 = arith.divf %38, %41 : vector<8x8xf32>
    %cst_15 = arith.constant dense<0.000000e+00> : vector<8x8xf32>
    %43 = tpu.matmul %42, %28, %cst_15 {dimension_numbers = #tpu.dot_dimension_numbers<[1], [0], [0], [1], [0, 0, 1, 1], [], []>} : vector<8x8xf32>, vector<8x8xf32>, vector<8x8xf32> -> vector<8x8xf32>
    %44 = vector.extract_strided_slice %3 {offsets = [0, 16], sizes = [8, 8], strides = [1, 1]} : vector<8x96xf32> to vector<8x8xf32>
    %45 = vector.extract_strided_slice %3 {offsets = [0, 48], sizes = [8, 8], strides = [1, 1]} : vector<8x96xf32> to vector<8x8xf32>
    %46 = vector.extract_strided_slice %3 {offsets = [0, 80], sizes = [8, 8], strides = [1, 1]} : vector<8x96xf32> to vector<8x8xf32>
    %cst_16 = arith.constant dense<0.000000e+00> : vector<8x8xf32>
    %47 = tpu.matmul %44, %45, %cst_16 {dimension_numbers = #tpu.dot_dimension_numbers<[1], [1], [0], [0], [0, 0, 1, 0], [], []>} : vector<8x8xf32>, vector<8x8xf32>, vector<8x8xf32> -> vector<8x8xf32>
    %48 = vector.broadcast %7 : f32 to vector<8x8xf32>
    %49 = arith.mulf %47, %48 : vector<8x8xf32>
    %cst_17 = arith.constant 0xFF800000 : f32
    %50 = vector.broadcast %cst_17 : f32 to vector<8x8xf32>
    %51 = arith.select %6, %49, %50 : vector<8x8xi1>, vector<8x8xf32>
    %cst_18 = arith.constant dense<0xFF800000> : vector<8xf32>
    %52 = vector.multi_reduction <maximumf>, %51, %cst_18 [1] : vector<8x8xf32> to vector<8xf32>
    %53 = vector.shape_cast %52 : vector<8xf32> to vector<8x1xf32>
    %54 = vector.broadcast %53 : vector<8x1xf32> to vector<8x8xf32>
    %55 = arith.subf %51, %54 : vector<8x8xf32>
    %56 = math.exp %55 : vector<8x8xf32>
    %cst_19 = arith.constant dense<0.000000e+00> : vector<8xf32>
    %57 = vector.multi_reduction <add>, %56, %cst_19 [1] : vector<8x8xf32> to vector<8xf32>
    %58 = vector.shape_cast %57 : vector<8xf32> to vector<8x1xf32>
    %59 = vector.broadcast %58 : vector<8x1xf32> to vector<8x8xf32>
    %60 = arith.divf %56, %59 : vector<8x8xf32>
    %cst_20 = arith.constant dense<0.000000e+00> : vector<8x8xf32>
    %61 = tpu.matmul %60, %46, %cst_20 {dimension_numbers = #tpu.dot_dimension_numbers<[1], [0], [0], [1], [0, 0, 1, 1], [], []>} : vector<8x8xf32>, vector<8x8xf32>, vector<8x8xf32> -> vector<8x8xf32>
    %62 = vector.extract_strided_slice %3 {offsets = [0, 24], sizes = [8, 8], strides = [1, 1]} : vector<8x96xf32> to vector<8x8xf32>
    %63 = vector.extract_strided_slice %3 {offsets = [0, 56], sizes = [8, 8], strides = [1, 1]} : vector<8x96xf32> to vector<8x8xf32>
    %64 = vector.extract_strided_slice %3 {offsets = [0, 88], sizes = [8, 8], strides = [1, 1]} : vector<8x96xf32> to vector<8x8xf32>
    %cst_21 = arith.constant dense<0.000000e+00> : vector<8x8xf32>
    %65 = tpu.matmul %62, %63, %cst_21 {dimension_numbers = #tpu.dot_dimension_numbers<[1], [1], [0], [0], [0, 0, 1, 0], [], []>} : vector<8x8xf32>, vector<8x8xf32>, vector<8x8xf32> -> vector<8x8xf32>
    %66 = vector.broadcast %7 : f32 to vector<8x8xf32>
    %67 = arith.mulf %65, %66 : vector<8x8xf32>
    %cst_22 = arith.constant 0xFF800000 : f32
    %68 = vector.broadcast %cst_22 : f32 to vector<8x8xf32>
    %69 = arith.select %6, %67, %68 : vector<8x8xi1>, vector<8x8xf32>
    %cst_23 = arith.constant dense<0xFF800000> : vector<8xf32>
    %70 = vector.multi_reduction <maximumf>, %69, %cst_23 [1] : vector<8x8xf32> to vector<8xf32>
    %71 = vector.shape_cast %70 : vector<8xf32> to vector<8x1xf32>
    %72 = vector.broadcast %71 : vector<8x1xf32> to vector<8x8xf32>
    %73 = arith.subf %69, %72 : vector<8x8xf32>
    %74 = math.exp %73 : vector<8x8xf32>
    %cst_24 = arith.constant dense<0.000000e+00> : vector<8xf32>
    %75 = vector.multi_reduction <add>, %74, %cst_24 [1] : vector<8x8xf32> to vector<8xf32>
    %76 = vector.shape_cast %75 : vector<8xf32> to vector<8x1xf32>
    %77 = vector.broadcast %76 : vector<8x1xf32> to vector<8x8xf32>
    %78 = arith.divf %74, %77 : vector<8x8xf32>
    %cst_25 = arith.constant dense<0.000000e+00> : vector<8x8xf32>
    %79 = tpu.matmul %78, %64, %cst_25 {dimension_numbers = #tpu.dot_dimension_numbers<[1], [0], [0], [1], [0, 0, 1, 1], [], []>} : vector<8x8xf32>, vector<8x8xf32>, vector<8x8xf32> -> vector<8x8xf32>
    %80 = tpu.concatenate %25, %43, %61, %79 in 1 : vector<8x8xf32>, vector<8x8xf32>, vector<8x8xf32>, vector<8x8xf32> -> vector<8x32xf32>
    %c0_26 = arith.constant 0 : index
    %c0_27 = arith.constant 0 : index
    %81 = vector.load %arg3[%c0_26, %c0_27] : memref<32x32xf32, #tpu.memory_space<vmem>>, vector<32x32xf32>
    %cst_28 = arith.constant dense<0.000000e+00> : vector<8x32xf32>
    %82 = tpu.matmul %80, %81, %cst_28 {dimension_numbers = #tpu.dot_dimension_numbers<[1], [0], [0], [1], [0, 0, 1, 1], [], []>} : vector<8x32xf32>, vector<32x32xf32>, vector<8x32xf32> -> vector<8x32xf32>
    %c0_29 = arith.constant 0 : index
    %c0_30 = arith.constant 0 : index
    %83 = vector.load %arg4[%c0_29, %c0_30] : memref<1x32xf32, #tpu.memory_space<vmem>>, vector<1x32xf32>
    %84 = vector.broadcast %83 : vector<1x32xf32> to vector<8x32xf32>
    %85 = arith.addf %82, %84 : vector<8x32xf32>
    %c0_31 = arith.constant 0 : index
    %c0_32 = arith.constant 0 : index
    %c0_33 = arith.constant 0 : index
    %86 = vector.load %arg5[%c0_31, %c0_32, %c0_33] : memref<1x8x32xf32, #tpu.memory_space<vmem>>, vector<1x8x32xf32>
    %87 = vector.shape_cast %86 : vector<1x8x32xf32> to vector<8x32xf32>
    %88 = vector.shape_cast %85 : vector<8x32xf32> to vector<1x8x32xf32>
    tpu.vector_store %arg5[%c0_31, %c0_32, %c0_33], %88 {strides = array<i32>} : memref<1x8x32xf32, #tpu.memory_space<vmem>>, vector<1x8x32xf32>,
    return
  }
  func.func @transform_0(%arg0: i32) -> (i32, i32, i32) {
    %c0_i32 = arith.constant 0 : i32
    %c0_i32_0 = arith.constant 0 : i32
    %c0_i32_1 = arith.constant 0 : i32
    return %arg0, %c0_i32, %c0_i32_0 : i32, i32, i32
  }
  func.func @transform_1(%arg0: i32) -> (i32, i32) {
    %c0_i32 = arith.constant 0 : i32
    %c0_i32_0 = arith.constant 0 : i32
    %c0_i32_1 = arith.constant 0 : i32
    return %c0_i32, %c0_i32_0 : i32, i32
  }
  func.func @transform_2(%arg0: i32) -> (i32, i32) {
    %c0_i32 = arith.constant 0 : i32
    %c0_i32_0 = arith.constant 0 : i32
    %c0_i32_1 = arith.constant 0 : i32
    return %c0_i32, %c0_i32_0 : i32, i32
  }
  func.func @transform_3(%arg0: i32) -> (i32, i32) {
    %c0_i32 = arith.constant 0 : i32
    %c0_i32_0 = arith.constant 0 : i32
    %c0_i32_1 = arith.constant 0 : i32
    return %c0_i32, %c0_i32_0 : i32, i32
  }
  func.func @transform_4(%arg0: i32) -> (i32, i32, i32) {
    %c0_i32 = arith.constant 0 : i32
    %c0_i32_0 = arith.constant 0 : i32
    %c0_i32_1 = arith.constant 0 : i32
    return %arg0, %c0_i32, %c0_i32_0 : i32, i32, i32
  }
}

</mosaic_0001>

<llo_original>
// kernel: tpu_custom_call.1
$region0: #{tpu_custom_call.1}
  #allocation0 [shape = 'u32[]', space=smem, size = 0x4, offset = 0x4, fixed_abs, tag = 'smem constant byte address 0x4 - core index']
  #allocation1 [shape = 'u32[144,128]{1,0:T(1,128)}', space=vmem, size = 0x12000, scoped, tag = 'internal scratch']
  %s0 = inlined_call_operand.hbm [shape: f32[2,8,32], index: 0, kind: input, shape index: {}]
  %s1 = inlined_call_operand.hbm [shape: f32[32,96], index: 1, kind: input, shape index: {}]
  %s2 = inlined_call_operand.hbm [shape: f32[32,32], index: 2, kind: input, shape index: {}]
  %s3 = inlined_call_operand.vmem [shape: f32[1,32], index: 3, kind: input, shape index: {}]
  %s4 = inlined_call_operand.hbm [shape: f32[2,8,32], index: 4, kind: output, shape index: {}]
  %s5 = sld [smem:[#allocation0]]
  $region61: #{tpu_custom_call.1} parent=0
    _
  %s7 = ssub.s32 1, %s5
  %s8 = scalar_select 0, %s7, %s5
  $region1: #{tpu_custom_call.1} parent=0
    #allocation2 [shape = 'u8[8192]{0}', space=vmem, size = 0x2000, scoped, tag = 'input window, operand 0']
    #allocation3 [shape = 's32[2]{0}', space=sflag, size = 0x8, scoped, tag = 'scoped memory for tpu_custom_call.1']
    #allocation4 [shape = 's32[2]{0}', space=sflag, size = 0x8, scoped, tag = 'scoped memory for tpu_custom_call.1']
    #allocation5 [shape = 'u8[16384]{0}', space=vmem, size = 0x4000, scoped, tag = 'input window, operand 1, single buffered']
    #allocation6 [shape = 's32[1]{0}', space=sflag, size = 0x4, scoped, tag = 'scoped memory for tpu_custom_call.1']
    #allocation7 [shape = 'u8[16384]{0}', space=vmem, size = 0x4000, scoped, tag = 'input window, operand 2, single buffered']
    #allocation8 [shape = 'u8[8192]{0}', space=vmem, size = 0x2000, scoped, tag = 'output window, operand 0']
    %9 = vsyncpa [#allocation3], 0
    %s10 = scalar_lea.sflag [#allocation3], 1
    %11 = vsyncpa %s10, 0
    %12 = vsyncpa [#allocation6], 0
    %13 = vsyncpa [#allocation4], 0
    %s14 = scalar_lea.sflag [#allocation4], 1
    %15 = vsyncpa %s14, 0
    loop: start=0, step=1, limit=4
    $region2: #{tpu_custom_call.1} parent=1 // loop_pre_header
      _
    $region3: #{tpu_custom_call.1} parent=1 // loop_header
      %s17 = sphi 0, %s21
      %p18 = scmp.ge.s32.totalorder %s17, 4
      %s27 = sphi 0, %s29
      %s30 = sphi 0, %s27
      %s31 = sphi 0, %s30
      %s47 = sphi 0, %s31
      %s51 = sphi 0, %s51
      %s53 = sphi 0, %s51
      %s54 = sphi 0, %s53
      %s68 = sphi 0, %s54
      %s72 = sphi 0, %s72
      %s74 = sphi 0, %s72
      %s75 = sphi 0, %s74
      %s89 = sphi 0, %s75
      %s93 = sphi 0, %s93
      %s95 = sphi 0, %s93
      %s96 = sphi 0, %s95
      %s110 = sphi 0, %s96
      %s116 = sphi 0, %s118
      %s119 = sphi 0, %s116
      %s120 = sphi 0, %s119
      %s136 = sphi 0, %s120
    $region4: #{tpu_custom_call.1} parent=1 // loop_header_branch
      %20 = sbr.rel (%p18) target = $region8
    $region5: #{tpu_custom_call.1} parent=1 // loop_body
      %s22 = ssub.s32 %s17, 1
      %s23 = ssub.s32 %s17, 2
      %s24 = sadd.s32 %s17, 1
      %s25 = ssub.s32 %s17, %s24
      %p26 = scmp.eq.s32.totalorder %s25, 0
      %s28 = sadd.s32 %s27, 1
      %s29 = scalar_select %p26, %s27, %s28
      %p32 = pneg %p26
      %p33 = scmp.eq.s32.totalorder %s17, 1
      %p34 = por %p32, %p33
      %p35 = scmp.ne.s32.totalorder %s27, %s30
      %p36 = scmp.eq.s32.totalorder %s17, 0
      %p37 = por %p35, %p36
      %p38 = scmp.ne.s32.totalorder %s27, %s30
      %p39 = scmp.eq.s32.totalorder %s22, 1
      %p40 = por %p38, %p39
      %p41 = scmp.ne.s32.totalorder %s30, %s31
      %p42 = scmp.eq.s32.totalorder %s22, 0
      %p43 = por %p41, %p42
      %p44 = scmp.ne.s32.totalorder %s30, %s31
      %p45 = scmp.eq.s32.totalorder %s23, 1
      %p46 = por %p44, %p45
      %p48 = scmp.ne.s32.totalorder %s31, %s47
      %p49 = scmp.eq.s32.totalorder %s23, 0
      %p50 = por %p48, %p49
      %s52 = sadd.s32 %s51, 1
      %p55 = scmp.eq.s32.totalorder %s17, 1
      %p56 = scmp.ne.s32.totalorder %s51, %s53
      %p57 = scmp.eq.s32.totalorder %s17, 0
      %p58 = por %p56, %p57
      %p59 = scmp.ne.s32.totalorder %s51, %s53
      %p60 = scmp.eq.s32.totalorder %s22, 1
      %p61 = por %p59, %p60
      %p62 = scmp.ne.s32.totalorder %s53, %s54
      %p63 = scmp.eq.s32.totalorder %s22, 0
      %p64 = por %p62, %p63
      %p65 = scmp.ne.s32.totalorder %s53, %s54
      %p66 = scmp.eq.s32.totalorder %s23, 1
      %p67 = por %p65, %p66
      %p69 = scmp.ne.s32.totalorder %s54, %s68
      %p70 = scmp.eq.s32.totalorder %s23, 0
      %p71 = por %p69, %p70
      %s73 = sadd.s32 %s72, 1
      %p76 = scmp.eq.s32.totalorder %s17, 1
      %p77 = scmp.ne.s32.totalorder %s72, %s74
      %p78 = scmp.eq.s32.totalorder %s17, 0
      %p79 = por %p77, %p78
      %p80 = scmp.ne.s32.totalorder %s72, %s74
      %p81 = scmp.eq.s32.totalorder %s22, 1
      %p82 = por %p80, %p81
      %p83 = scmp.ne.s32.totalorder %s74, %s75
      %p84 = scmp.eq.s32.totalorder %s22, 0
      %p85 = por %p83, %p84
      %p86 = scmp.ne.s32.totalorder %s74, %s75
      %p87 = scmp.eq.s32.totalorder %s23, 1
      %p88 = por %p86, %p87
      %p90 = scmp.ne.s32.totalorder %s75, %s89
      %p91 = scmp.eq.s32.totalorder %s23, 0
      %p92 = por %p90, %p91
      %s94 = sadd.s32 %s93, 1
      %p97 = scmp.eq.s32.totalorder %s17, 1
      %p98 = scmp.ne.s32.totalorder %s93, %s95
      %p99 = scmp.eq.s32.totalorder %s17, 0
      %p100 = por %p98, %p99
      %p101 = scmp.ne.s32.totalorder %s93, %s95
      %p102 = scmp.eq.s32.totalorder %s22, 1
      %p103 = por %p101, %p102
      %p104 = scmp.ne.s32.totalorder %s95, %s96
      %p105 = scmp.eq.s32.totalorder %s22, 0
      %p106 = por %p104, %p105
      %p107 = scmp.ne.s32.totalorder %s95, %s96
      %p108 = scmp.eq.s32.totalorder %s23, 1
      %p109 = por %p107, %p108
      %p111 = scmp.ne.s32.totalorder %s96, %s110
      %p112 = scmp.eq.s32.totalorder %s23, 0
      %p113 = por %p111, %p112
      %s114 = ssub.s32 %s17, %s24
      %p115 = scmp.eq.s32.totalorder %s114, 0
      %s117 = sadd.s32 %s116, 1
      %s118 = scalar_select %p115, %s116, %s117
      %p121 = pneg %p115
      %p122 = scmp.eq.s32.totalorder %s17, 1
      %p123 = por %p121, %p122
      %p124 = scmp.ne.s32.totalorder %s116, %s119
      %p125 = scmp.eq.s32.totalorder %s17, 0
      %p126 = por %p124, %p125
      %p127 = scmp.ne.s32.totalorder %s116, %s119
      %p128 = scmp.eq.s32.totalorder %s22, 1
      %p129 = por %p127, %p128
      %p130 = scmp.ne.s32.totalorder %s119, %s120
      %p131 = scmp.eq.s32.totalorder %s22, 0
      %p132 = por %p130, %p131
      %p133 = scmp.ne.s32.totalorder %s119, %s120
      %p134 = scmp.eq.s32.totalorder %s23, 1
      %p135 = por %p133, %p134
      %p137 = scmp.ne.s32.totalorder %s120, %s136
      %p138 = scmp.eq.s32.totalorder %s23, 0
      %p139 = por %p137, %p138
      %p140 = scmp.le.s32.totalorder 1, %s17
      %p141 = scmp.lt.s32.totalorder %s17, 3
      %p142 = pnand %p140, %p141
      %p143 = pneg %p142
      // Predicated region
      $region9: #{tpu_custom_call.1} parent=5 // pred_check
        _
      $region10: #{tpu_custom_call.1} parent=5 // pred_check_branch
        %145 = sbr.rel (%p142) target = $region12
      $region11: #{tpu_custom_call.1} parent=5 // pred_region
        %s146 = ssub.s32 %s17, 1
        // Predicated region
        $region13: #{tpu_custom_call.1} parent=11 // pred_check
          %p147 = pneg %p64
        $region14: #{tpu_custom_call.1} parent=11 // pred_check_branch
          %149 = sbr.rel (%p147) target = $region16
        $region15: #{tpu_custom_call.1} parent=11 // pred_region
          %s151 = ssub.s32 512, 512
          %152 = vsyncadd [#allocation6], %s151
          %s153 = sshll.u32 [#allocation5], 4
          %s154 = int_to_ptr.vmem [resolvable:$true] %s153
          %159 = dma.hbm_to_vmem [thread:$0]  %s1, 512, %s154, [#allocation6], 128, 128, 8
        $region16: #{tpu_custom_call.1} parent=11 // pred_fallthru
          _
        // Predicated region
        $region17: #{tpu_custom_call.1} parent=11 // pred_check
          %p160 = pneg %p85
        $region18: #{tpu_custom_call.1} parent=11 // pred_check_branch
          %162 = sbr.rel (%p160) target = $region20
        $region19: #{tpu_custom_call.1} parent=11 // pred_region
          %s164 = ssub.s32 512, 512
          %165 = vsyncadd [#allocation6], %s164
          %s166 = sshll.u32 [#allocation7], 4
          %s167 = int_to_ptr.vmem [resolvable:$true] %s166
          %172 = dma.hbm_to_vmem [thread:$0]  %s2, 512, %s167, [#allocation6], 128, 128, 8
        $region20: #{tpu_custom_call.1} parent=11 // pred_fallthru
          _
        // Predicated region
        $region21: #{tpu_custom_call.1} parent=11 // pred_check
          %p173 = pneg %p106
        $region22: #{tpu_custom_call.1} parent=11 // pred_check_branch
          %175 = sbr.rel (%p173) target = $region24
        $region23: #{tpu_custom_call.1} parent=11 // pred_region
          _
        $region24: #{tpu_custom_call.1} parent=11 // pred_fallthru
          _
      $region12: #{tpu_custom_call.1} parent=5 // pred_fallthru
        _
      %p176 = scmp.lt.s32.totalorder %s17, 2
      // Predicated region
      $region25: #{tpu_custom_call.1} parent=5 // pred_check
        %p177 = pneg %p176
      $region26: #{tpu_custom_call.1} parent=5 // pred_check_branch
        %179 = sbr.rel (%p177) target = $region28
      $region27: #{tpu_custom_call.1} parent=5 // pred_region
        // Predicated region
        $region29: #{tpu_custom_call.1} parent=27 // pred_check
          %p180 = pneg %p37
        $region30: #{tpu_custom_call.1} parent=27 // pred_check_branch
          %182 = sbr.rel (%p180) target = $region32
        $region31: #{tpu_custom_call.1} parent=27 // pred_region
          %s183 = sand.u32 %s27, 1
          %s184 = scalar_lea.sflag [#allocation3], %s183
          %s185 = sand.u32 %s27, 1
          %s186 = smul.addr %s185, 8
          %s187 = scalar_lea.vmem [#allocation2], %s186
          %s189 = ssub.s32 128, 128
          %190 = vsyncadd %s184, %s189
          %s191 = smul.addr %s17, 128
          %s192 = scalar_lea.hbm %s0, %s191
          %s194 = sshll.u32 %s187, 4
          %s195 = int_to_ptr.vmem [resolvable:$true] %s194
          %197 = dma.hbm_to_vmem [thread:$0]  %s192, 128, %s195, %s184
        $region32: #{tpu_custom_call.1} parent=27 // pred_fallthru
          _
      $region28: #{tpu_custom_call.1} parent=5 // pred_fallthru
        _
      %p198 = scmp.le.s32.totalorder 1, %s17
      %p199 = scmp.lt.s32.totalorder %s17, 3
      %p200 = pnand %p198, %p199
      %p201 = pneg %p200
      // Predicated region
      $region33: #{tpu_custom_call.1} parent=5 // pred_check
        _
      $region34: #{tpu_custom_call.1} parent=5 // pred_check_branch
        %203 = sbr.rel (%p200) target = $region36
      $region35: #{tpu_custom_call.1} parent=5 // pred_region
        %s204 = ssub.s32 %s17, 1
        %s205 = sand.u32 %s30, 1
        %s206 = scalar_lea.sflag [#allocation3], %s205
        %s207 = sand.u32 %s30, 1
        %s208 = smul.addr %s207, 8
        %s209 = scalar_lea.vmem [#allocation2], %s208
        // Predicated region
        $region37: #{tpu_custom_call.1} parent=35 // pred_check
          %p210 = pneg %p43
        $region38: #{tpu_custom_call.1} parent=35 // pred_check_branch
          %212 = sbr.rel (%p210) target = $region40
        $region39: #{tpu_custom_call.1} parent=35 // pred_region
          %213 = dma.done %s206, 128
        $region40: #{tpu_custom_call.1} parent=35 // pred_fallthru
          _
        // Predicated region
        $region41: #{tpu_custom_call.1} parent=35 // pred_check
          %p214 = pneg %p64
        $region42: #{tpu_custom_call.1} parent=35 // pred_check_branch
          %216 = sbr.rel (%p214) target = $region44
        $region43: #{tpu_custom_call.1} parent=35 // pred_region
          %217 = dma.done [#allocation6], 512
        $region44: #{tpu_custom_call.1} parent=35 // pred_fallthru
          _
        // Predicated region
        $region45: #{tpu_custom_call.1} parent=35 // pred_check
          %p218 = pneg %p85
        $region46: #{tpu_custom_call.1} parent=35 // pred_check_branch
          %220 = sbr.rel (%p218) target = $region48
        $region47: #{tpu_custom_call.1} parent=35 // pred_region
          %221 = dma.done [#allocation6], 512
        $region48: #{tpu_custom_call.1} parent=35 // pred_fallthru
          _
        %s222 = sand.u32 %s30, 1
        %s223 = scalar_lea.sflag [#allocation3], %s222
        %s224 = sand.u32 %s30, 1
        %s225 = smul.addr %s224, 8
        %s226 = scalar_lea.vmem [#allocation2], %s225
        %p227 = pneg %p43
        %p228 = pneg %p40
        %p229 = pneg %p64
        %p230 = pneg %p61
        %p231 = pneg %p85
        %p232 = pneg %p82
        %p233 = pneg %p106
        %p234 = pneg %p103
        %p235 = pneg %p132
        %p236 = pneg %p129
        %s237 = sand.u32 %s119, 1
        %s238 = scalar_lea.sflag [#allocation4], %s237
        %s239 = sand.u32 %s119, 1
        %s240 = smul.addr %s239, 8
        %s241 = scalar_lea.vmem [#allocation8], %s240
        %v242 = vld [vmem:[%s209] sm:$0xff]
        %v243 = vld [vmem:[#allocation5] sm:$0xff]
        %v244 = vld [vmem:[#allocation5 + $0x8] sm:$0xff]
        %v245 = vld [vmem:[#allocation5 + $0x10] sm:$0xff]
        %v246 = vld [vmem:[#allocation5 + $0x18] sm:$0xff]
        %vm247 = vcmask 261120
        %v249 = vsel %vm247, %v242, 0
        %251 = vmatprep.subr.mxu0 0.0
        %252 = vmatpush1.msra.mxu0 %v243
        %253 = vmatprep.subr.mxu0 0.0
        %254 = vmatpush1.msra.mxu0 %v244
        %255 = vmatprep.subr.mxu0 0.0
        %256 = vmatpush1.msra.mxu0 %v245
        %257 = vmatprep.subr.mxu0 0.0
        %258 = vmatpush1.msra.mxu0 %v246
        %259 = vmatprep.subr.mxu0 0.0
        %260 = vmatpush1.msra.mxu0 0.0
        %261 = vmatprep.subr.mxu0 0.0
        %262 = vmatpush1.msra.mxu0 0.0
        %263 = vmatprep.subr.mxu0 0.0
        %264 = vmatpush1.msra.mxu0 0.0
        %265 = vmatprep.subr.mxu0 0.0
        %266 = vmatpush1.msra.mxu0 0.0
        %267 = vmatprep.subr.mxu0 0.0
        %268 = vmatpush1.msra.mxu0 0.0
        %269 = vmatprep.subr.mxu0 0.0
        %270 = vmatpush1.msra.mxu0 0.0
        %271 = vmatprep.subr.mxu0 0.0
        %272 = vmatpush1.msra.mxu0 0.0
        %273 = vmatprep.subr.mxu0 0.0
        %274 = vmatpush1.msra.mxu0 0.0
        %275 = vmatprep.subr.mxu0 0.0
        %276 = vmatpush1.msra.mxu0 0.0
        %277 = vmatprep.subr.mxu0 0.0
        %278 = vmatpush1.msra.mxu0 0.0
        %279 = vmatprep.subr.mxu0 0.0
        %280 = vmatpush1.msra.mxu0 0.0
        %281 = vmatprep.subr.mxu0 0.0
        %282 = vmatpush1.msra.mxu0 0.0
        %283 = vmatprep.subr.mxu0 0.0
        %284 = vmatpush1.msra.mxu0 0.0
        %285 = vmatprep.subr.mxu0 0.0
        %286 = vmatpush1.msra.mxu0 0.0
        %287 = vmatprep.subr.mxu0 0.0
        %288 = vmatpush1.msra.mxu0 0.0
        %289 = vmatprep.subr.mxu0 0.0
        %290 = vmatpush1.msra.mxu0 0.0
        %291 = vmatprep.subr.mxu0 0.0
        %292 = vmatpush1.msra.mxu0 0.0
        %293 = vmatprep.subr.mxu0 0.0
        %294 = vmatpush1.msra.mxu0 0.0
        %295 = vmatprep.subr.mxu0 0.0
        %296 = vmatpush1.msra.mxu0 0.0
        %297 = vmatprep.subr.mxu0 0.0
        %298 = vmatpush1.msra.mxu0 0.0
        %299 = vmatprep.subr.mxu0 0.0
        %300 = vmatpush1.msra.mxu0 0.0
        %301 = vmatprep.subr.mxu0 0.0
        %302 = vmatpush1.msra.mxu0 0.0
        %303 = vmatprep.subr.mxu0 0.0
        %304 = vmatpush1.msra.mxu0 0.0
        %305 = vmatprep.subr.mxu0 0.0
        %306 = vmatpush1.msra.mxu0 0.0
        %307 = vmatprep.subr.mxu0 0.0
        %308 = vmatpush1.msra.mxu0 0.0
        %309 = vmatprep.subr.mxu0 0.0
        %310 = vmatpush1.msra.mxu0 0.0
        %311 = vmatprep.subr.mxu0 0.0
        %312 = vmatpush1.msra.mxu0 0.0
        %313 = vmatprep.subr.mxu0 0.0
        %314 = vmatpush1.msra.mxu0 0.0
        %315 = vmatprep.mubr.f32.mxu0 0.0
        %316 = vmatmul.mubr.f32.gmra.mrb[0].mxu0 %v249
        %v317 = vpop.f32.mrb[0].mxu0
        %v318 = vadd.f32 0.0, %v317
        %v319 = vpop.f32.mrb[0].mxu0
        %320 = vdwg.mxu0
        %v321 = vlaneseq
        %v322 = vshrl.u32 %v321, 7
        %v323 = vlaneseq
        %v324 = vand.u32 %v323, 127
        %vm325 = vcmp.le.s32.totalorder %v324, %v322
        %327 = vrot.lane.b32.xlu0 %v318, 96
        %v328 = vpop.permute.xlu0 %327
        %vm329 = vcmask 64512
        %v330 = vsel %vm329, %v318, 0
        %v332 = vsel %vm329, %v328, 0
        %334 = vmatprep.subr.mxu0 0.0
        %335 = vmatpush1.xpose.msra.mxu0 %v332
        %336 = vmatprep.subr.mxu0 0.0
        %337 = vmatpush1.xpose.msra.mxu0 0.0
        %338 = vmatprep.subr.mxu0 0.0
        %339 = vmatpush1.xpose.msra.mxu0 0.0
        %340 = vmatprep.subr.mxu0 0.0
        %341 = vmatpush1.xpose.msra.mxu0 0.0
        %342 = vmatprep.subr.mxu0 0.0
        %343 = vmatpush1.xpose.msra.mxu0 0.0
        %344 = vmatprep.subr.mxu0 0.0
        %345 = vmatpush1.xpose.msra.mxu0 0.0
        %346 = vmatprep.subr.mxu0 0.0
        %347 = vmatpush1.xpose.msra.mxu0 0.0
        %348 = vmatprep.subr.mxu0 0.0
        %349 = vmatpush1.xpose.msra.mxu0 0.0
        %350 = vmatprep.subr.mxu0 0.0
        %351 = vmatpush1.xpose.msra.mxu0 0.0
        %352 = vmatprep.subr.mxu0 0.0
        %353 = vmatpush1.xpose.msra.mxu0 0.0
        %354 = vmatprep.subr.mxu0 0.0
        %355 = vmatpush1.xpose.msra.mxu0 0.0
        %356 = vmatprep.subr.mxu0 0.0
        %357 = vmatpush1.xpose.msra.mxu0 0.0
        %358 = vmatprep.subr.mxu0 0.0
        %359 = vmatpush1.xpose.msra.mxu0 0.0
        %360 = vmatprep.subr.mxu0 0.0
        %361 = vmatpush1.xpose.msra.mxu0 0.0
        %362 = vmatprep.subr.mxu0 0.0
        %363 = vmatpush1.xpose.msra.mxu0 0.0
        %364 = vmatprep.subr.mxu0 0.0
        %365 = vmatpush1.xpose.msra.mxu0 0.0
        %366 = vmatprep.subr.mxu0 0.0
        %367 = vmatpush1.xpose.msra.mxu0 0.0
        %368 = vmatprep.subr.mxu0 0.0
        %369 = vmatpush1.xpose.msra.mxu0 0.0
        %370 = vmatprep.subr.mxu0 0.0
        %371 = vmatpush1.xpose.msra.mxu0 0.0
        %372 = vmatprep.subr.mxu0 0.0
        %373 = vmatpush1.xpose.msra.mxu0 0.0
        %374 = vmatprep.subr.mxu0 0.0
        %375 = vmatpush1.xpose.msra.mxu0 0.0
        %376 = vmatprep.subr.mxu0 0.0
        %377 = vmatpush1.xpose.msra.mxu0 0.0
        %378 = vmatprep.subr.mxu0 0.0
        %379 = vmatpush1.xpose.msra.mxu0 0.0
        %380 = vmatprep.subr.mxu0 0.0
        %381 = vmatpush1.xpose.msra.mxu0 0.0
        %382 = vmatprep.subr.mxu0 0.0
        %383 = vmatpush1.xpose.msra.mxu0 0.0
        %384 = vmatprep.subr.mxu0 0.0
        %385 = vmatpush1.xpose.msra.mxu0 0.0
        %386 = vmatprep.subr.mxu0 0.0
        %387 = vmatpush1.xpose.msra.mxu0 0.0
        %388 = vmatprep.subr.mxu0 0.0
        %389 = vmatpush1.xpose.msra.mxu0 0.0
        %390 = vmatprep.subr.mxu0 0.0
        %391 = vmatpush1.xpose.msra.mxu0 0.0
        %392 = vmatprep.subr.mxu0 0.0
        %393 = vmatpush1.xpose.msra.mxu0 0.0
        %394 = vmatprep.subr.mxu0 0.0
        %395 = vmatpush1.xpose.msra.mxu0 0.0
        %396 = vmatprep.subr.mxu0 0.0
        %397 = vmatpush1.xpose.msra.mxu0 0.0
        %398 = vmatprep.mubr.f32.mxu0 0.0
        %399 = vmatmul.mubr.f32.gmra.mrb[0].mxu0 %v330
        %v400 = vpop.f32.mrb[0].mxu0
        %v401 = vadd.f32 0.0, %v400
        %v402 = vpop.f32.mrb[0].mxu0
        %403 = vdwg.mxu0
        %v404 = vmul.f32 %v401, 0.35355338
        %v405 = vsel %vm325, %v404, -inf
        %v406 = vsel %vm329, %v405, -inf
        %407 = vmax.xlane.f32.xlu0 %v406
        %v408 = vpop.xlane.xlu0 %407
        %v409 = vsub.f32 %v405, %v408
        %v410 = vmul.f32 %v409, 1.442695
        %v411 = vpow.pop %v410
        %v412 = vsel %vm329, %v411, 0.0
        %413 = vadd.xlane.f32.xlu0 %v412
        %v414 = vpop.xlane.xlu0 %413
        %v415 = vrcp.pop %v414
        %v416 = vmul.f32 %v411, %v415
        %417 = vrot.lane.b32.xlu0 %v318, 64
        %v418 = vpop.permute.xlu0 %417
        %v421 = vsel %vm329, %v416, 0
        %423 = vmatprep.subr.mxu0 0.0
        %424 = vmatpush1.msra.mxu0 %v418
        %425 = vmatprep.subr.mxu0 0.0
        %426 = vmatpush1.msra.mxu0 0.0
        %427 = vmatprep.subr.mxu0 0.0
        %428 = vmatpush1.msra.mxu0 0.0
        %429 = vmatprep.subr.mxu0 0.0
        %430 = vmatpush1.msra.mxu0 0.0
        %431 = vmatprep.subr.mxu0 0.0
        %432 = vmatpush1.msra.mxu0 0.0
        %433 = vmatprep.subr.mxu0 0.0
        %434 = vmatpush1.msra.mxu0 0.0
        %435 = vmatprep.subr.mxu0 0.0
        %436 = vmatpush1.msra.mxu0 0.0
        %437 = vmatprep.subr.mxu0 0.0
        %438 = vmatpush1.msra.mxu0 0.0
        %439 = vmatprep.subr.mxu0 0.0
        %440 = vmatpush1.msra.mxu0 0.0
        %441 = vmatprep.subr.mxu0 0.0
        %442 = vmatpush1.msra.mxu0 0.0
        %443 = vmatprep.subr.mxu0 0.0
        %444 = vmatpush1.msra.mxu0 0.0
        %445 = vmatprep.subr.mxu0 0.0
        %446 = vmatpush1.msra.mxu0 0.0
        %447 = vmatprep.subr.mxu0 0.0
        %448 = vmatpush1.msra.mxu0 0.0
        %449 = vmatprep.subr.mxu0 0.0
        %450 = vmatpush1.msra.mxu0 0.0
        %451 = vmatprep.subr.mxu0 0.0
        %452 = vmatpush1.msra.mxu0 0.0
        %453 = vmatprep.subr.mxu0 0.0
        %454 = vmatpush1.msra.mxu0 0.0
        %455 = vmatprep.subr.mxu0 0.0
        %456 = vmatpush1.msra.mxu0 0.0
        %457 = vmatprep.subr.mxu0 0.0
        %458 = vmatpush1.msra.mxu0 0.0
        %459 = vmatprep.subr.mxu0 0.0
        %460 = vmatpush1.msra.mxu0 0.0
        %461 = vmatprep.subr.mxu0 0.0
        %462 = vmatpush1.msra.mxu0 0.0
        %463 = vmatprep.subr.mxu0 0.0
        %464 = vmatpush1.msra.mxu0 0.0
        %465 = vmatprep.subr.mxu0 0.0
        %466 = vmatpush1.msra.mxu0 0.0
        %467 = vmatprep.subr.mxu0 0.0
        %468 = vmatpush1.msra.mxu0 0.0
        %469 = vmatprep.subr.mxu0 0.0
        %470 = vmatpush1.msra.mxu0 0.0
        %471 = vmatprep.subr.mxu0 0.0
        %472 = vmatpush1.msra.mxu0 0.0
        %473 = vmatprep.subr.mxu0 0.0
        %474 = vmatpush1.msra.mxu0 0.0
        %475 = vmatprep.subr.mxu0 0.0
        %476 = vmatpush1.msra.mxu0 0.0
        %477 = vmatprep.subr.mxu0 0.0
        %478 = vmatpush1.msra.mxu0 0.0
        %479 = vmatprep.subr.mxu0 0.0
        %480 = vmatpush1.msra.mxu0 0.0
        %481 = vmatprep.subr.mxu0 0.0
        %482 = vmatpush1.msra.mxu0 0.0
        %483 = vmatprep.subr.mxu0 0.0
        %484 = vmatpush1.msra.mxu0 0.0
        %485 = vmatprep.subr.mxu0 0.0
        %486 = vmatpush1.msra.mxu0 0.0
        %487 = vmatprep.mubr.f32.mxu0 0.0
        %488 = vmatmul.mubr.f32.gmra.mrb[0].mxu0 %v421
        %v489 = vpop.f32.mrb[0].mxu0
        %v490 = vadd.f32 0.0, %v489
        %v491 = vpop.f32.mrb[0].mxu0
        %492 = vdwg.mxu0
        %493 = vrot.lane.b32.xlu0 %v318, 120
        %v494 = vpop.permute.xlu0 %493
        %495 = vrot.lane.b32.xlu0 %v318, 88
        %v496 = vpop.permute.xlu0 %495
        %v497 = vsel %vm329, %v494, 0
        %v499 = vsel %vm329, %v496, 0
        %501 = vmatprep.subr.mxu0 0.0
        %502 = vmatpush1.xpose.msra.mxu0 %v499
        %503 = vmatprep.subr.mxu0 0.0
        %504 = vmatpush1.xpose.msra.mxu0 0.0
        %505 = vmatprep.subr.mxu0 0.0
        %506 = vmatpush1.xpose.msra.mxu0 0.0
        %507 = vmatprep.subr.mxu0 0.0
        %508 = vmatpush1.xpose.msra.mxu0 0.0
        %509 = vmatprep.subr.mxu0 0.0
        %510 = vmatpush1.xpose.msra.mxu0 0.0
        %511 = vmatprep.subr.mxu0 0.0
        %512 = vmatpush1.xpose.msra.mxu0 0.0
        %513 = vmatprep.subr.mxu0 0.0
        %514 = vmatpush1.xpose.msra.mxu0 0.0
        %515 = vmatprep.subr.mxu0 0.0
        %516 = vmatpush1.xpose.msra.mxu0 0.0
        %517 = vmatprep.subr.mxu0 0.0
        %518 = vmatpush1.xpose.msra.mxu0 0.0
        %519 = vmatprep.subr.mxu0 0.0
        %520 = vmatpush1.xpose.msra.mxu0 0.0
        %521 = vmatprep.subr.mxu0 0.0
        %522 = vmatpush1.xpose.msra.mxu0 0.0
        %523 = vmatprep.subr.mxu0 0.0
        %524 = vmatpush1.xpose.msra.mxu0 0.0
        %525 = vmatprep.subr.mxu0 0.0
        %526 = vmatpush1.xpose.msra.mxu0 0.0
        %527 = vmatprep.subr.mxu0 0.0
        %528 = vmatpush1.xpose.msra.mxu0 0.0
        %529 = vmatprep.subr.mxu0 0.0
        %530 = vmatpush1.xpose.msra.mxu0 0.0
        %531 = vmatprep.subr.mxu0 0.0
        %532 = vmatpush1.xpose.msra.mxu0 0.0
        %533 = vmatprep.subr.mxu0 0.0
        %534 = vmatpush1.xpose.msra.mxu0 0.0
        %535 = vmatprep.subr.mxu0 0.0
        %536 = vmatpush1.xpose.msra.mxu0 0.0
        %537 = vmatprep.subr.mxu0 0.0
        %538 = vmatpush1.xpose.msra.mxu0 0.0
        %539 = vmatprep.subr.mxu0 0.0
        %540 = vmatpush1.xpose.msra.mxu0 0.0
        %541 = vmatprep.subr.mxu0 0.0
        %542 = vmatpush1.xpose.msra.mxu0 0.0
        %543 = vmatprep.subr.mxu0 0.0
        %544 = vmatpush1.xpose.msra.mxu0 0.0
        %545 = vmatprep.subr.mxu0 0.0
        %546 = vmatpush1.xpose.msra.mxu0 0.0
        %547 = vmatprep.subr.mxu0 0.0
        %548 = vmatpush1.xpose.msra.mxu0 0.0
        %549 = vmatprep.subr.mxu0 0.0
        %550 = vmatpush1.xpose.msra.mxu0 0.0
        %551 = vmatprep.subr.mxu0 0.0
        %552 = vmatpush1.xpose.msra.mxu0 0.0
        %553 = vmatprep.subr.mxu0 0.0
        %554 = vmatpush1.xpose.msra.mxu0 0.0
        %555 = vmatprep.subr.mxu0 0.0
        %556 = vmatpush1.xpose.msra.mxu0 0.0
        %557 = vmatprep.subr.mxu0 0.0
        %558 = vmatpush1.xpose.msra.mxu0 0.0
        %559 = vmatprep.subr.mxu0 0.0
        %560 = vmatpush1.xpose.msra.mxu0 0.0
        %561 = vmatprep.subr.mxu0 0.0
        %562 = vmatpush1.xpose.msra.mxu0 0.0
        %563 = vmatprep.subr.mxu0 0.0
        %564 = vmatpush1.xpose.msra.mxu0 0.0
        %565 = vmatprep.mubr.f32.mxu0 0.0
        %566 = vmatmul.mubr.f32.gmra.mrb[0].mxu0 %v497
        %v567 = vpop.f32.mrb[0].mxu0
        %v568 = vadd.f32 0.0, %v567
        %v569 = vpop.f32.mrb[0].mxu0
        %570 = vdwg.mxu0
        %v571 = vmul.f32 %v568, 0.35355338
        %v572 = vsel %vm325, %v571, -inf
        %v573 = vsel %vm329, %v572, -inf
        %574 = vmax.xlane.f32.xlu0 %v573
        %v575 = vpop.xlane.xlu0 %574
        %v576 = vsub.f32 %v572, %v575
        %v577 = vmul.f32 %v576, 1.442695
        %v578 = vpow.pop %v577
        %v579 = vsel %vm329, %v578, 0.0
        %580 = vadd.xlane.f32.xlu0 %v579
        %v581 = vpop.xlane.xlu0 %580
        %v582 = vrcp.pop %v581
        %v583 = vmul.f32 %v578, %v582
        %584 = vrot.lane.b32.xlu0 %v318, 56
        %v585 = vpop.permute.xlu0 %584
        %v588 = vsel %vm329, %v583, 0
        %590 = vmatprep.subr.mxu0 0.0
        %591 = vmatpush1.msra.mxu0 %v585
        %592 = vmatprep.subr.mxu0 0.0
        %593 = vmatpush1.msra.mxu0 0.0
        %594 = vmatprep.subr.mxu0 0.0
        %595 = vmatpush1.msra.mxu0 0.0
        %596 = vmatprep.subr.mxu0 0.0
        %597 = vmatpush1.msra.mxu0 0.0
        %598 = vmatprep.subr.mxu0 0.0
        %599 = vmatpush1.msra.mxu0 0.0
        %600 = vmatprep.subr.mxu0 0.0
        %601 = vmatpush1.msra.mxu0 0.0
        %602 = vmatprep.subr.mxu0 0.0
        %603 = vmatpush1.msra.mxu0 0.0
        %604 = vmatprep.subr.mxu0 0.0
        %605 = vmatpush1.msra.mxu0 0.0
        %606 = vmatprep.subr.mxu0 0.0
        %607 = vmatpush1.msra.mxu0 0.0
        %608 = vmatprep.subr.mxu0 0.0
        %609 = vmatpush1.msra.mxu0 0.0
        %610 = vmatprep.subr.mxu0 0.0
        %611 = vmatpush1.msra.mxu0 0.0
        %612 = vmatprep.subr.mxu0 0.0
        %613 = vmatpush1.msra.mxu0 0.0
        %614 = vmatprep.subr.mxu0 0.0
        %615 = vmatpush1.msra.mxu0 0.0
        %616 = vmatprep.subr.mxu0 0.0
        %617 = vmatpush1.msra.mxu0 0.0
        %618 = vmatprep.subr.mxu0 0.0
        %619 = vmatpush1.msra.mxu0 0.0
        %620 = vmatprep.subr.mxu0 0.0
        %621 = vmatpush1.msra.mxu0 0.0
        %622 = vmatprep.subr.mxu0 0.0
        %623 = vmatpush1.msra.mxu0 0.0
        %624 = vmatprep.subr.mxu0 0.0
        %625 = vmatpush1.msra.mxu0 0.0
        %626 = vmatprep.subr.mxu0 0.0
        %627 = vmatpush1.msra.mxu0 0.0
        %628 = vmatprep.subr.mxu0 0.0
        %629 = vmatpush1.msra.mxu0 0.0
        %630 = vmatprep.subr.mxu0 0.0
        %631 = vmatpush1.msra.mxu0 0.0
        %632 = vmatprep.subr.mxu0 0.0
        %633 = vmatpush1.msra.mxu0 0.0
        %634 = vmatprep.subr.mxu0 0.0
        %635 = vmatpush1.msra.mxu0 0.0
        %636 = vmatprep.subr.mxu0 0.0
        %637 = vmatpush1.msra.mxu0 0.0
        %638 = vmatprep.subr.mxu0 0.0
        %639 = vmatpush1.msra.mxu0 0.0
        %640 = vmatprep.subr.mxu0 0.0
        %641 = vmatpush1.msra.mxu0 0.0
        %642 = vmatprep.subr.mxu0 0.0
        %643 = vmatpush1.msra.mxu0 0.0
        %644 = vmatprep.subr.mxu0 0.0
        %645 = vmatpush1.msra.mxu0 0.0
        %646 = vmatprep.subr.mxu0 0.0
        %647 = vmatpush1.msra.mxu0 0.0
        %648 = vmatprep.subr.mxu0 0.0
        %649 = vmatpush1.msra.mxu0 0.0
        %650 = vmatprep.subr.mxu0 0.0
        %651 = vmatpush1.msra.mxu0 0.0
        %652 = vmatprep.subr.mxu0 0.0
        %653 = vmatpush1.msra.mxu0 0.0
        %654 = vmatprep.mubr.f32.mxu0 0.0
        %655 = vmatmul.mubr.f32.gmra.mrb[0].mxu0 %v588
        %v656 = vpop.f32.mrb[0].mxu0
        %v657 = vadd.f32 0.0, %v656
        %v658 = vpop.f32.mrb[0].mxu0
        %659 = vdwg.mxu0
        %660 = vrot.lane.b32.xlu0 %v318, 112
        %v661 = vpop.permute.xlu0 %660
        %662 = vrot.lane.b32.xlu0 %v318, 80
        %v663 = vpop.permute.xlu0 %662
        %v664 = vsel %vm329, %v661, 0
        %v666 = vsel %vm329, %v663, 0
        %668 = vmatprep.subr.mxu0 0.0
        %669 = vmatpush1.xpose.msra.mxu0 %v666
        %670 = vmatprep.subr.mxu0 0.0
        %671 = vmatpush1.xpose.msra.mxu0 0.0
        %672 = vmatprep.subr.mxu0 0.0
        %673 = vmatpush1.xpose.msra.mxu0 0.0
        %674 = vmatprep.subr.mxu0 0.0
        %675 = vmatpush1.xpose.msra.mxu0 0.0
        %676 = vmatprep.subr.mxu0 0.0
        %677 = vmatpush1.xpose.msra.mxu0 0.0
        %678 = vmatprep.subr.mxu0 0.0
        %679 = vmatpush1.xpose.msra.mxu0 0.0
        %680 = vmatprep.subr.mxu0 0.0
        %681 = vmatpush1.xpose.msra.mxu0 0.0
        %682 = vmatprep.subr.mxu0 0.0
        %683 = vmatpush1.xpose.msra.mxu0 0.0
        %684 = vmatprep.subr.mxu0 0.0
        %685 = vmatpush1.xpose.msra.mxu0 0.0
        %686 = vmatprep.subr.mxu0 0.0
        %687 = vmatpush1.xpose.msra.mxu0 0.0
        %688 = vmatprep.subr.mxu0 0.0
        %689 = vmatpush1.xpose.msra.mxu0 0.0
        %690 = vmatprep.subr.mxu0 0.0
        %691 = vmatpush1.xpose.msra.mxu0 0.0
        %692 = vmatprep.subr.mxu0 0.0
        %693 = vmatpush1.xpose.msra.mxu0 0.0
        %694 = vmatprep.subr.mxu0 0.0
        %695 = vmatpush1.xpose.msra.mxu0 0.0
        %696 = vmatprep.subr.mxu0 0.0
        %697 = vmatpush1.xpose.msra.mxu0 0.0
        %698 = vmatprep.subr.mxu0 0.0
        %699 = vmatpush1.xpose.msra.mxu0 0.0
        %700 = vmatprep.subr.mxu0 0.0
        %701 = vmatpush1.xpose.msra.mxu0 0.0
        %702 = vmatprep.subr.mxu0 0.0
        %703 = vmatpush1.xpose.msra.mxu0 0.0
        %704 = vmatprep.subr.mxu0 0.0
        %705 = vmatpush1.xpose.msra.mxu0 0.0
        %706 = vmatprep.subr.mxu0 0.0
        %707 = vmatpush1.xpose.msra.mxu0 0.0
        %708 = vmatprep.subr.mxu0 0.0
        %709 = vmatpush1.xpose.msra.mxu0 0.0
        %710 = vmatprep.subr.mxu0 0.0
        %711 = vmatpush1.xpose.msra.mxu0 0.0
        %712 = vmatprep.subr.mxu0 0.0
        %713 = vmatpush1.xpose.msra.mxu0 0.0
        %714 = vmatprep.subr.mxu0 0.0
        %715 = vmatpush1.xpose.msra.mxu0 0.0
        %716 = vmatprep.subr.mxu0 0.0
        %717 = vmatpush1.xpose.msra.mxu0 0.0
        %718 = vmatprep.subr.mxu0 0.0
        %719 = vmatpush1.xpose.msra.mxu0 0.0
        %720 = vmatprep.subr.mxu0 0.0
        %721 = vmatpush1.xpose.msra.mxu0 0.0
        %722 = vmatprep.subr.mxu0 0.0
        %723 = vmatpush1.xpose.msra.mxu0 0.0
        %724 = vmatprep.subr.mxu0 0.0
        %725 = vmatpush1.xpose.msra.mxu0 0.0
        %726 = vmatprep.subr.mxu0 0.0
        %727 = vmatpush1.xpose.msra.mxu0 0.0
        %728 = vmatprep.subr.mxu0 0.0
        %729 = vmatpush1.xpose.msra.mxu0 0.0
        %730 = vmatprep.subr.mxu0 0.0
        %731 = vmatpush1.xpose.msra.mxu0 0.0
        %732 = vmatprep.mubr.f32.mxu0 0.0
        %733 = vmatmul.mubr.f32.gmra.mrb[0].mxu0 %v664
        %v734 = vpop.f32.mrb[0].mxu0
        %v735 = vadd.f32 0.0, %v734
        %v736 = vpop.f32.mrb[0].mxu0
        %737 = vdwg.mxu0
        %v738 = vmul.f32 %v735, 0.35355338
        %v739 = vsel %vm325, %v738, -inf
        %v740 = vsel %vm329, %v739, -inf
        %741 = vmax.xlane.f32.xlu0 %v740
        %v742 = vpop.xlane.xlu0 %741
        %v743 = vsub.f32 %v739, %v742
        %v744 = vmul.f32 %v743, 1.442695
        %v745 = vpow.pop %v744
        %v746 = vsel %vm329, %v745, 0.0
        %747 = vadd.xlane.f32.xlu0 %v746
        %v748 = vpop.xlane.xlu0 %747
        %v749 = vrcp.pop %v748
        %v750 = vmul.f32 %v745, %v749
        %751 = vrot.lane.b32.xlu0 %v318, 48
        %v752 = vpop.permute.xlu0 %751
        %v755 = vsel %vm329, %v750, 0
        %757 = vmatprep.subr.mxu0 0.0
        %758 = vmatpush1.msra.mxu0 %v752
        %759 = vmatprep.subr.mxu0 0.0
        %760 = vmatpush1.msra.mxu0 0.0
        %761 = vmatprep.subr.mxu0 0.0
        %762 = vmatpush1.msra.mxu0 0.0
        %763 = vmatprep.subr.mxu0 0.0
        %764 = vmatpush1.msra.mxu0 0.0
        %765 = vmatprep.subr.mxu0 0.0
        %766 = vmatpush1.msra.mxu0 0.0
        %767 = vmatprep.subr.mxu0 0.0
        %768 = vmatpush1.msra.mxu0 0.0
        %769 = vmatprep.subr.mxu0 0.0
        %770 = vmatpush1.msra.mxu0 0.0
        %771 = vmatprep.subr.mxu0 0.0
        %772 = vmatpush1.msra.mxu0 0.0
        %773 = vmatprep.subr.mxu0 0.0
        %774 = vmatpush1.msra.mxu0 0.0
        %775 = vmatprep.subr.mxu0 0.0
        %776 = vmatpush1.msra.mxu0 0.0
        %777 = vmatprep.subr.mxu0 0.0
        %778 = vmatpush1.msra.mxu0 0.0
        %779 = vmatprep.subr.mxu0 0.0
        %780 = vmatpush1.msra.mxu0 0.0
        %781 = vmatprep.subr.mxu0 0.0
        %782 = vmatpush1.msra.mxu0 0.0
        %783 = vmatprep.subr.mxu0 0.0
        %784 = vmatpush1.msra.mxu0 0.0
        %785 = vmatprep.subr.mxu0 0.0
        %786 = vmatpush1.msra.mxu0 0.0
        %787 = vmatprep.subr.mxu0 0.0
        %788 = vmatpush1.msra.mxu0 0.0
        %789 = vmatprep.subr.mxu0 0.0
        %790 = vmatpush1.msra.mxu0 0.0
        %791 = vmatprep.subr.mxu0 0.0
        %792 = vmatpush1.msra.mxu0 0.0
        %793 = vmatprep.subr.mxu0 0.0
        %794 = vmatpush1.msra.mxu0 0.0
        %795 = vmatprep.subr.mxu0 0.0
        %796 = vmatpush1.msra.mxu0 0.0
        %797 = vmatprep.subr.mxu0 0.0
        %798 = vmatpush1.msra.mxu0 0.0
        %799 = vmatprep.subr.mxu0 0.0
        %800 = vmatpush1.msra.mxu0 0.0
        %801 = vmatprep.subr.mxu0 0.0
        %802 = vmatpush1.msra.mxu0 0.0
        %803 = vmatprep.subr.mxu0 0.0
        %804 = vmatpush1.msra.mxu0 0.0
        %805 = vmatprep.subr.mxu0 0.0
        %806 = vmatpush1.msra.mxu0 0.0
        %807 = vmatprep.subr.mxu0 0.0
        %808 = vmatpush1.msra.mxu0 0.0
        %809 = vmatprep.subr.mxu0 0.0
        %810 = vmatpush1.msra.mxu0 0.0
        %811 = vmatprep.subr.mxu0 0.0
        %812 = vmatpush1.msra.mxu0 0.0
        %813 = vmatprep.subr.mxu0 0.0
        %814 = vmatpush1.msra.mxu0 0.0
        %815 = vmatprep.subr.mxu0 0.0
        %816 = vmatpush1.msra.mxu0 0.0
        %817 = vmatprep.subr.mxu0 0.0
        %818 = vmatpush1.msra.mxu0 0.0
        %819 = vmatprep.subr.mxu0 0.0
        %820 = vmatpush1.msra.mxu0 0.0
        %821 = vmatprep.mubr.f32.mxu0 0.0
        %822 = vmatmul.mubr.f32.gmra.mrb[0].mxu0 %v755
        %v823 = vpop.f32.mrb[0].mxu0
        %v824 = vadd.f32 0.0, %v823
        %v825 = vpop.f32.mrb[0].mxu0
        %826 = vdwg.mxu0
        %827 = vrot.lane.b32.xlu0 %v318, 104
        %v828 = vpop.permute.xlu0 %827
        %829 = vrot.lane.b32.xlu0 %v318, 72
        %v830 = vpop.permute.xlu0 %829
        %v831 = vsel %vm329, %v828, 0
        %v833 = vsel %vm329, %v830, 0
        %835 = vmatprep.subr.mxu0 0.0
        %836 = vmatpush1.xpose.msra.mxu0 %v833
        %837 = vmatprep.subr.mxu0 0.0
        %838 = vmatpush1.xpose.msra.mxu0 0.0
        %839 = vmatprep.subr.mxu0 0.0
        %840 = vmatpush1.xpose.msra.mxu0 0.0
        %841 = vmatprep.subr.mxu0 0.0
        %842 = vmatpush1.xpose.msra.mxu0 0.0
        %843 = vmatprep.subr.mxu0 0.0
        %844 = vmatpush1.xpose.msra.mxu0 0.0
        %845 = vmatprep.subr.mxu0 0.0
        %846 = vmatpush1.xpose.msra.mxu0 0.0
        %847 = vmatprep.subr.mxu0 0.0
        %848 = vmatpush1.xpose.msra.mxu0 0.0
        %849 = vmatprep.subr.mxu0 0.0
        %850 = vmatpush1.xpose.msra.mxu0 0.0
        %851 = vmatprep.subr.mxu0 0.0
        %852 = vmatpush1.xpose.msra.mxu0 0.0
        %853 = vmatprep.subr.mxu0 0.0
        %854 = vmatpush1.xpose.msra.mxu0 0.0
        %855 = vmatprep.subr.mxu0 0.0
        %856 = vmatpush1.xpose.msra.mxu0 0.0
        %857 = vmatprep.subr.mxu0 0.0
        %858 = vmatpush1.xpose.msra.mxu0 0.0
        %859 = vmatprep.subr.mxu0 0.0
        %860 = vmatpush1.xpose.msra.mxu0 0.0
        %861 = vmatprep.subr.mxu0 0.0
        %862 = vmatpush1.xpose.msra.mxu0 0.0
        %863 = vmatprep.subr.mxu0 0.0
        %864 = vmatpush1.xpose.msra.mxu0 0.0
        %865 = vmatprep.subr.mxu0 0.0
        %866 = vmatpush1.xpose.msra.mxu0 0.0
        %867 = vmatprep.subr.mxu0 0.0
        %868 = vmatpush1.xpose.msra.mxu0 0.0
        %869 = vmatprep.subr.mxu0 0.0
        %870 = vmatpush1.xpose.msra.mxu0 0.0
        %871 = vmatprep.subr.mxu0 0.0
        %872 = vmatpush1.xpose.msra.mxu0 0.0
        %873 = vmatprep.subr.mxu0 0.0
        %874 = vmatpush1.xpose.msra.mxu0 0.0
        %875 = vmatprep.subr.mxu0 0.0
        %876 = vmatpush1.xpose.msra.mxu0 0.0
        %877 = vmatprep.subr.mxu0 0.0
        %878 = vmatpush1.xpose.msra.mxu0 0.0
        %879 = vmatprep.subr.mxu0 0.0
        %880 = vmatpush1.xpose.msra.mxu0 0.0
        %881 = vmatprep.subr.mxu0 0.0
        %882 = vmatpush1.xpose.msra.mxu0 0.0
        %883 = vmatprep.subr.mxu0 0.0
        %884 = vmatpush1.xpose.msra.mxu0 0.0
        %885 = vmatprep.subr.mxu0 0.0
        %886 = vmatpush1.xpose.msra.mxu0 0.0
        %887 = vmatprep.subr.mxu0 0.0
        %888 = vmatpush1.xpose.msra.mxu0 0.0
        %889 = vmatprep.subr.mxu0 0.0
        %890 = vmatpush1.xpose.msra.mxu0 0.0
        %891 = vmatprep.subr.mxu0 0.0
        %892 = vmatpush1.xpose.msra.mxu0 0.0
        %893 = vmatprep.subr.mxu0 0.0
        %894 = vmatpush1.xpose.msra.mxu0 0.0
        %895 = vmatprep.subr.mxu0 0.0
        %896 = vmatpush1.xpose.msra.mxu0 0.0
        %897 = vmatprep.subr.mxu0 0.0
        %898 = vmatpush1.xpose.msra.mxu0 0.0
        %899 = vmatprep.mubr.f32.mxu0 0.0
        %900 = vmatmul.mubr.f32.gmra.mrb[0].mxu0 %v831
        %v901 = vpop.f32.mrb[0].mxu0
        %v902 = vadd.f32 0.0, %v901
        %v903 = vpop.f32.mrb[0].mxu0
        %904 = vdwg.mxu0
        %v905 = vmul.f32 %v902, 0.35355338
        %v906 = vsel %vm325, %v905, -inf
        %v907 = vsel %vm329, %v906, -inf
        %908 = vmax.xlane.f32.xlu0 %v907
        %v909 = vpop.xlane.xlu0 %908
        %v910 = vsub.f32 %v906, %v909
        %v911 = vmul.f32 %v910, 1.442695
        %v912 = vpow.pop %v911
        %v913 = vsel %vm329, %v912, 0.0
        %914 = vadd.xlane.f32.xlu0 %v913
        %v915 = vpop.xlane.xlu0 %914
        %v916 = vrcp.pop %v915
        %v917 = vmul.f32 %v912, %v916
        %918 = vrot.lane.b32.xlu0 %v318, 40
        %v919 = vpop.permute.xlu0 %918
        %v922 = vsel %vm329, %v917, 0
        %924 = vmatprep.subr.mxu0 0.0
        %925 = vmatpush1.msra.mxu0 %v919
        %926 = vmatprep.subr.mxu0 0.0
        %927 = vmatpush1.msra.mxu0 0.0
        %928 = vmatprep.subr.mxu0 0.0
        %929 = vmatpush1.msra.mxu0 0.0
        %930 = vmatprep.subr.mxu0 0.0
        %931 = vmatpush1.msra.mxu0 0.0
        %932 = vmatprep.subr.mxu0 0.0
        %933 = vmatpush1.msra.mxu0 0.0
        %934 = vmatprep.subr.mxu0 0.0
        %935 = vmatpush1.msra.mxu0 0.0
        %936 = vmatprep.subr.mxu0 0.0
        %937 = vmatpush1.msra.mxu0 0.0
        %938 = vmatprep.subr.mxu0 0.0
        %939 = vmatpush1.msra.mxu0 0.0
        %940 = vmatprep.subr.mxu0 0.0
        %941 = vmatpush1.msra.mxu0 0.0
        %942 = vmatprep.subr.mxu0 0.0
        %943 = vmatpush1.msra.mxu0 0.0
        %944 = vmatprep.subr.mxu0 0.0
        %945 = vmatpush1.msra.mxu0 0.0
        %946 = vmatprep.subr.mxu0 0.0
        %947 = vmatpush1.msra.mxu0 0.0
        %948 = vmatprep.subr.mxu0 0.0
        %949 = vmatpush1.msra.mxu0 0.0
        %950 = vmatprep.subr.mxu0 0.0
        %951 = vmatpush1.msra.mxu0 0.0
        %952 = vmatprep.subr.mxu0 0.0
        %953 = vmatpush1.msra.mxu0 0.0
        %954 = vmatprep.subr.mxu0 0.0
        %955 = vmatpush1.msra.mxu0 0.0
        %956 = vmatprep.subr.mxu0 0.0
        %957 = vmatpush1.msra.mxu0 0.0
        %958 = vmatprep.subr.mxu0 0.0
        %959 = vmatpush1.msra.mxu0 0.0
        %960 = vmatprep.subr.mxu0 0.0
        %961 = vmatpush1.msra.mxu0 0.0
        %962 = vmatprep.subr.mxu0 0.0
        %963 = vmatpush1.msra.mxu0 0.0
        %964 = vmatprep.subr.mxu0 0.0
        %965 = vmatpush1.msra.mxu0 0.0
        %966 = vmatprep.subr.mxu0 0.0
        %967 = vmatpush1.msra.mxu0 0.0
        %968 = vmatprep.subr.mxu0 0.0
        %969 = vmatpush1.msra.mxu0 0.0
        %970 = vmatprep.subr.mxu0 0.0
        %971 = vmatpush1.msra.mxu0 0.0
        %972 = vmatprep.subr.mxu0 0.0
        %973 = vmatpush1.msra.mxu0 0.0
        %974 = vmatprep.subr.mxu0 0.0
        %975 = vmatpush1.msra.mxu0 0.0
        %976 = vmatprep.subr.mxu0 0.0
        %977 = vmatpush1.msra.mxu0 0.0
        %978 = vmatprep.subr.mxu0 0.0
        %979 = vmatpush1.msra.mxu0 0.0
        %980 = vmatprep.subr.mxu0 0.0
        %981 = vmatpush1.msra.mxu0 0.0
        %982 = vmatprep.subr.mxu0 0.0
        %983 = vmatpush1.msra.mxu0 0.0
        %984 = vmatprep.subr.mxu0 0.0
        %985 = vmatpush1.msra.mxu0 0.0
        %986 = vmatprep.subr.mxu0 0.0
        %987 = vmatpush1.msra.mxu0 0.0
        %988 = vmatprep.mubr.f32.mxu0 0.0
        %989 = vmatmul.mubr.f32.gmra.mrb[0].mxu0 %v922
        %v990 = vpop.f32.mrb[0].mxu0
        %v991 = vadd.f32 0.0, %v990
        %v992 = vpop.f32.mrb[0].mxu0
        %993 = vdwg.mxu0
        %995 = vrot.lane.b32.xlu0 %v657, 8
        %v996 = vpop.permute.xlu0 %995
        %999 = vrot.lane.b32.xlu0 %v824, 16
        %v1000 = vpop.permute.xlu0 %999
        %1003 = vrot.lane.b32.xlu0 %v991, 24
        %v1004 = vpop.permute.xlu0 %1003
        %v1006 = vsel %vm329, %v490, %v996
        %vm1007 = vcmask 130048
        %v1008 = vsel %vm1007, %v1006, %v1000
        %vm1009 = vcmask 195584
        %v1010 = vsel %vm1009, %v1008, %v1004
        %v1011 = vld [vmem:[#allocation7] sm:$0xff]
        %v1012 = vld [vmem:[#allocation7 + $0x8] sm:$0xff]
        %v1013 = vld [vmem:[#allocation7 + $0x10] sm:$0xff]
        %v1014 = vld [vmem:[#allocation7 + $0x18] sm:$0xff]
        %v1015 = vld [vmem:[%s3] sm:$0x1]
        %v1017 = vlaneseq
        %v1018 = vshrl.u32 %v1017, 7
        %v1019 = vsub.s32 0, %v1018
        %v1020 = vrot.slane %v1015, %v1019
        %v1023 = vsel %vm247, %v1010, 0
        %1025 = vmatprep.subr.mxu0 0.0
        %1026 = vmatpush1.msra.mxu0 %v1011
        %1027 = vmatprep.subr.mxu0 0.0
        %1028 = vmatpush1.msra.mxu0 %v1012
        %1029 = vmatprep.subr.mxu0 0.0
        %1030 = vmatpush1.msra.mxu0 %v1013
        %1031 = vmatprep.subr.mxu0 0.0
        %1032 = vmatpush1.msra.mxu0 %v1014
        %1033 = vmatprep.subr.mxu0 0.0
        %1034 = vmatpush1.msra.mxu0 0.0
        %1035 = vmatprep.subr.mxu0 0.0
        %1036 = vmatpush1.msra.mxu0 0.0
        %1037 = vmatprep.subr.mxu0 0.0
        %1038 = vmatpush1.msra.mxu0 0.0
        %1039 = vmatprep.subr.mxu0 0.0
        %1040 = vmatpush1.msra.mxu0 0.0
        %1041 = vmatprep.subr.mxu0 0.0
        %1042 = vmatpush1.msra.mxu0 0.0
        %1043 = vmatprep.subr.mxu0 0.0
        %1044 = vmatpush1.msra.mxu0 0.0
        %1045 = vmatprep.subr.mxu0 0.0
        %1046 = vmatpush1.msra.mxu0 0.0
        %1047 = vmatprep.subr.mxu0 0.0
        %1048 = vmatpush1.msra.mxu0 0.0
        %1049 = vmatprep.subr.mxu0 0.0
        %1050 = vmatpush1.msra.mxu0 0.0
        %1051 = vmatprep.subr.mxu0 0.0
        %1052 = vmatpush1.msra.mxu0 0.0
        %1053 = vmatprep.subr.mxu0 0.0
        %1054 = vmatpush1.msra.mxu0 0.0
        %1055 = vmatprep.subr.mxu0 0.0
        %1056 = vmatpush1.msra.mxu0 0.0
        %1057 = vmatprep.subr.mxu0 0.0
        %1058 = vmatpush1.msra.mxu0 0.0
        %1059 = vmatprep.subr.mxu0 0.0
        %1060 = vmatpush1.msra.mxu0 0.0
        %1061 = vmatprep.subr.mxu0 0.0
        %1062 = vmatpush1.msra.mxu0 0.0
        %1063 = vmatprep.subr.mxu0 0.0
        %1064 = vmatpush1.msra.mxu0 0.0
        %1065 = vmatprep.subr.mxu0 0.0
        %1066 = vmatpush1.msra.mxu0 0.0
        %1067 = vmatprep.subr.mxu0 0.0
        %1068 = vmatpush1.msra.mxu0 0.0
        %1069 = vmatprep.subr.mxu0 0.0
        %1070 = vmatpush1.msra.mxu0 0.0
        %1071 = vmatprep.subr.mxu0 0.0
        %1072 = vmatpush1.msra.mxu0 0.0
        %1073 = vmatprep.subr.mxu0 0.0
        %1074 = vmatpush1.msra.mxu0 0.0
        %1075 = vmatprep.subr.mxu0 0.0
        %1076 = vmatpush1.msra.mxu0 0.0
        %1077 = vmatprep.subr.mxu0 0.0
        %1078 = vmatpush1.msra.mxu0 0.0
        %1079 = vmatprep.subr.mxu0 0.0
        %1080 = vmatpush1.msra.mxu0 0.0
        %1081 = vmatprep.subr.mxu0 0.0
        %1082 = vmatpush1.msra.mxu0 0.0
        %1083 = vmatprep.subr.mxu0 0.0
        %1084 = vmatpush1.msra.mxu0 0.0
        %1085 = vmatprep.subr.mxu0 0.0
        %1086 = vmatpush1.msra.mxu0 0.0
        %1087 = vmatprep.subr.mxu0 0.0
        %1088 = vmatpush1.msra.mxu0 0.0
        %1089 = vmatprep.mubr.f32.mxu0 0.0
        %1090 = vmatmul.mubr.f32.gmra.mrb[0].mxu0 %v1023
        %v1091 = vpop.f32.mrb[0].mxu0
        %v1092 = vadd.f32 %v1020, %v1091
        %v1093 = vpop.f32.mrb[0].mxu0
        %1094 = vdwg.mxu0
        %1095 = vst.msk [vmem:[%s241] sm:$0xff] %vm247, %v1092
        %s1096 = sand.u32 %s119, 1
        %s1097 = scalar_lea.sflag [#allocation4], %s1096
        %s1098 = sand.u32 %s119, 1
        %s1099 = smul.addr %s1098, 8
        %s1100 = scalar_lea.vmem [#allocation8], %s1099
        // Predicated region
        $region49: #{tpu_custom_call.1} parent=35 // pred_check
          %p1101 = pneg %p129
        $region50: #{tpu_custom_call.1} parent=35 // pred_check_branch
          %1103 = sbr.rel (%p1101) target = $region52
        $region51: #{tpu_custom_call.1} parent=35 // pred_region
          %s1105 = ssub.s32 128, 128
          %1106 = vsyncadd %s1097, %s1105
          %s1107 = smul.addr %s22, 128
          %s1108 = scalar_lea.hbm %s4, %s1107
          %s1110 = sshll.u32 %s1100, 4
          %s1111 = int_to_ptr.vmem [resolvable:$true] %s1110
          %1113 = dma.vmem_to_hbm [thread:$0]  %s1111, 128, %s1108, %s1097
        $region52: #{tpu_custom_call.1} parent=35 // pred_fallthru
          _
      $region36: #{tpu_custom_call.1} parent=5 // pred_fallthru
        _
      %p1114 = scmp.le.s32.totalorder 2, %s17
      // Predicated region
      $region53: #{tpu_custom_call.1} parent=5 // pred_check
        %p1115 = pneg %p1114
      $region54: #{tpu_custom_call.1} parent=5 // pred_check_branch
        %1117 = sbr.rel (%p1115) target = $region56
      $region55: #{tpu_custom_call.1} parent=5 // pred_region
        %s1118 = ssub.s32 %s17, 2
        // Predicated region
        $region57: #{tpu_custom_call.1} parent=55 // pred_check
          %p1119 = pneg %p135
        $region58: #{tpu_custom_call.1} parent=55 // pred_check_branch
          %1121 = sbr.rel (%p1119) target = $region60
        $region59: #{tpu_custom_call.1} parent=55 // pred_region
          %s1122 = sand.u32 %s120, 1
          %s1123 = scalar_lea.sflag [#allocation4], %s1122
          %s1124 = sand.u32 %s120, 1
          %s1125 = smul.addr %s1124, 8
          %s1126 = scalar_lea.vmem [#allocation8], %s1125
          %1127 = dma.done %s1123, 128
        $region60: #{tpu_custom_call.1} parent=55 // pred_fallthru
          _
      $region56: #{tpu_custom_call.1} parent=5 // pred_fallthru
        _
    $region6: #{tpu_custom_call.1} parent=1 // loop_footer
      %s21 = sadd.s32 1, %s17
    $region7: #{tpu_custom_call.1} parent=1 // loop_footer_branch
      %16 = sbr.rel target = $region3
    $region8: #{tpu_custom_call.1} parent=1 // loop_exit
      _
    %1128 = vsyncpa [#allocation3], 1
    %s1129 = scalar_lea.sflag [#allocation3], 1
    %1130 = vsyncpa %s1129, 1
    %1131 = vsyncpa [#allocation6], 1
    %1132 = vsyncpa [#allocation4], 1
    %s1133 = scalar_lea.sflag [#allocation4], 1
    %1134 = vsyncpa %s1133, 1

</llo_original>
